<compile_context>
chip_gen: v7x
topology: tpu7x:2x2x1
jax: 0.10.0
libtpu: 0.0.40
codegen_flags: <defaults>
</compile_context>

<pallas_src>
import functools

import numpy as np
import jax
import jax.numpy as jnp
from jax import lax
from jax.experimental import pallas as pl
from jax.experimental.pallas import tpu as pltpu

EPS = 1e-5


def _shift_lane(v, d):
    """s[..., p] = v[..., (p + d) % L] via static slice + lane concat (np.roll by -d)."""
    L = v.shape[-1]
    dd = d % L
    if dd == 0:
        return v
    return jnp.concatenate([v[..., dd:], v[..., :dd]], axis=-1)


def residual_block_kernel(x_ref, m_ref, w1_ref, g1_ref, b1_ref,
                          w2_ref, g2_ref, b2_ref, out_ref, *, H, W, cin, cout):
    x = x_ref[0]                                      # (cin, H*W) f32, lane-dense

    def conv3x3(v, w_ref_):
        # v: (c, H*W);  w_ref_: (cout, 9*c)  -> (cout, H*W)
        parts = []
        for ky in range(3):
            for kx in range(3):
                t = ky * 3 + kx
                d = (ky - 1) * W + (kx - 1)
                shifted = _shift_lane(v, d)           # flat rotation by tap offset
                parts.append(shifted * m_ref[t:t + 1, :])   # zero invalid (pad) lanes
        cols = jnp.concatenate(parts, axis=0)         # im2col tile (9*c, H*W)
        return jnp.dot(w_ref_[...], cols, preferred_element_type=jnp.float32)

    def inorm(h, g_ref_, b_ref_):
        # per-channel stats over the lane (H*W) axis; biased variance, eps=1e-5
        mean = jnp.mean(h, axis=1, keepdims=True)
        var = jnp.mean(jnp.square(h - mean), axis=1, keepdims=True)
        return (h - mean) * lax.rsqrt(var + EPS) * g_ref_[...] + b_ref_[...]

    # conv1 -> IN1 -> ReLU
    h = jnp.maximum(inorm(conv3x3(x, w1_ref), g1_ref, b1_ref), 0.0)
    # conv2 -> IN2
    h2 = inorm(conv3x3(h, w2_ref), g2_ref, b2_ref)
    # residual add
    out_ref[0] = (x + h2).astype(out_ref.dtype)


def _tap_masks(H, W):
    """(9, H*W) f32 validity masks for the 9 conv taps (encodes zero padding)."""
    yy, xx = np.meshgrid(np.arange(H), np.arange(W), indexing="ij")
    masks = []
    for ky in range(3):
        for kx in range(3):
            dy, dx = ky - 1, kx - 1
            valid = ((yy + dy >= 0) & (yy + dy < H) &
                     (xx + dx >= 0) & (xx + dx < W))
            masks.append(valid.reshape(H * W))
    return jnp.asarray(np.stack(masks, 0), dtype=jnp.float32)


def residual_block(x_nchw, w1_oihw, g1, b1, w2_oihw, g2, b2):
    N, C, H, W = x_nchw.shape
    cout = w1_oihw.shape[0]
    assert C == cout, "residual add requires dim_in == dim_out"
    HW = H * W

    # Activations: free reshape only (no transpose, no pad).
    x_flat = x_nchw.reshape(N, C, HW).astype(jnp.float32)

    # Weights: OIHW -> (O, ky, kx, I) -> (O, 9*I); tap-major matches im2col rows.
    w1_2d = jnp.transpose(w1_oihw, (0, 2, 3, 1)).reshape(cout, 9 * C).astype(jnp.float32)
    w2_2d = jnp.transpose(w2_oihw, (0, 2, 3, 1)).reshape(cout, 9 * cout).astype(jnp.float32)
    g1r = g1.reshape(cout, 1).astype(jnp.float32)
    b1r = b1.reshape(cout, 1).astype(jnp.float32)
    g2r = g2.reshape(cout, 1).astype(jnp.float32)
    b2r = b2.reshape(cout, 1).astype(jnp.float32)

    masks = _tap_masks(H, W)                           # (9, HW)

    kernel = functools.partial(residual_block_kernel, H=H, W=W, cin=C, cout=cout)

    out_flat = pl.pallas_call(
        kernel,
        out_shape=jax.ShapeDtypeStruct((N, cout, HW), jnp.float32),
        grid_spec=pltpu.PrefetchScalarGridSpec(
            num_scalar_prefetch=0,
            grid=(N,),
            in_specs=[
                pl.BlockSpec((1, C, HW), lambda n: (n, 0, 0)),
                pl.BlockSpec((9, HW), lambda n: (0, 0)),
                pl.BlockSpec((cout, 9 * C), lambda n: (0, 0)),
                pl.BlockSpec((cout, 1), lambda n: (0, 0)),
                pl.BlockSpec((cout, 1), lambda n: (0, 0)),
                pl.BlockSpec((cout, 9 * cout), lambda n: (0, 0)),
                pl.BlockSpec((cout, 1), lambda n: (0, 0)),
                pl.BlockSpec((cout, 1), lambda n: (0, 0)),
            ],
            out_specs=pl.BlockSpec((1, cout, HW), lambda n: (n, 0, 0)),
        ),
        compiler_params=pltpu.CompilerParams(
            dimension_semantics=("parallel",)),        # lets v7x split batch across TCs
    )(x_flat, masks, w1_2d, g1r, b1r, w2_2d, g2r, b2r)

    return out_flat.reshape(N, cout, H, W)             # free reshape back to NCHW


def ref_forward(x, w1, g1, b1, w2, g2, b2):
    """Pure-JAX reference mirroring the PyTorch module (training-mode IN)."""
    def conv(h, w):
        return lax.conv_general_dilated(
            h, w, window_strides=(1, 1), padding=((1, 1), (1, 1)),
            dimension_numbers=('NCHW', 'OIHW', 'NCHW'))

    def inorm(y, g, b):
        mean = jnp.mean(y, axis=(2, 3), keepdims=True)
        var = jnp.mean((y - mean) ** 2, axis=(2, 3), keepdims=True)
        yn = (y - mean) * lax.rsqrt(var + EPS)
        return yn * g.reshape(1, -1, 1, 1) + b.reshape(1, -1, 1, 1)

    h = jnp.maximum(inorm(conv(x, w1), g1, b1), 0.0)
    h = inorm(conv(h, w2), g2, b2)
    return x + h


if __name__ == "__main__":
    N, C, H, W = 2, 4, 16, 16          # dim_in = dim_out = 4
    key = jax.random.PRNGKey(0)
    kx, kw1, kw2, kg1, kb1, kg2, kb2 = jax.random.split(key, 7)

    x = jax.random.normal(kx, (N, C, H, W), jnp.float32)
    w1 = 0.2 * jax.random.normal(kw1, (C, C, 3, 3), jnp.float32)   # Conv2d(dim_in, dim_out, 3)
    w2 = 0.2 * jax.random.normal(kw2, (C, C, 3, 3), jnp.float32)   # Conv2d(dim_out, dim_out, 3)
    g1 = 1.0 + 0.1 * jax.random.normal(kg1, (C,), jnp.float32)     # IN affine weight
    b1 = 0.1 * jax.random.normal(kb1, (C,), jnp.float32)           # IN affine bias
    g2 = 1.0 + 0.1 * jax.random.normal(kg2, (C,), jnp.float32)
    b2 = 0.1 * jax.random.normal(kb2, (C,), jnp.float32)

    out = residual_block(x, w1, g1, b1, w2, g2, b2)
    out = jax.block_until_ready(out)

    ref = ref_forward(x, w1, g1, b1, w2, g2, b2)
    assert out.shape == (N, C, H, W)
    assert jnp.allclose(out, ref, rtol=1e-3, atol=1e-3), float(jnp.max(jnp.abs(out - ref)))

    print("KERNEL_OK")
</pallas_src>

<mosaic_0001>
module attributes {stable_mosaic.version = 11 : i64} {
  func.func @residual_block_kernel(%arg0: i32, %arg1: memref<1x4x256xf32, #tpu.memory_space<vmem>>, %arg2: memref<9x256xf32, #tpu.memory_space<vmem>>, %arg3: memref<4x36xf32, #tpu.memory_space<vmem>>, %arg4: memref<4x1xf32, #tpu.memory_space<vmem>>, %arg5: memref<4x1xf32, #tpu.memory_space<vmem>>, %arg6: memref<4x36xf32, #tpu.memory_space<vmem>>, %arg7: memref<4x1xf32, #tpu.memory_space<vmem>>, %arg8: memref<4x1xf32, #tpu.memory_space<vmem>>, %arg9: memref<1x4x256xf32, #tpu.memory_space<vmem>>) attributes {dimension_semantics = [#tpu.dimension_semantics<parallel>], iteration_bounds = array<i64: 2>, scalar_prefetch = 0 : i64, scratch_operands = 0 : i64, tpu.core_type = #tpu.core_type<tc>, window_params = [{transform_indices = @transform_0, window_bounds = array<i64: 1, 4, 256>}, {pipeline_mode = #tpu.pipeline_mode<synchronous>, transform_indices = @transform_1, window_bounds = array<i64: 9, 256>}, {pipeline_mode = #tpu.pipeline_mode<synchronous>, transform_indices = @transform_2, window_bounds = array<i64: 4, 36>}, {pipeline_mode = #tpu.pipeline_mode<synchronous>, transform_indices = @transform_3, window_bounds = array<i64: 4, 1>}, {pipeline_mode = #tpu.pipeline_mode<synchronous>, transform_indices = @transform_4, window_bounds = array<i64: 4, 1>}, {pipeline_mode = #tpu.pipeline_mode<synchronous>, transform_indices = @transform_5, window_bounds = array<i64: 4, 36>}, {pipeline_mode = #tpu.pipeline_mode<synchronous>, transform_indices = @transform_6, window_bounds = array<i64: 4, 1>}, {pipeline_mode = #tpu.pipeline_mode<synchronous>, transform_indices = @transform_7, window_bounds = array<i64: 4, 1>}, {transform_indices = @transform_8, window_bounds = array<i64: 1, 4, 256>}]} {
    %c0 = arith.constant 0 : index
    %c0_0 = arith.constant 0 : index
    %c0_1 = arith.constant 0 : index
    %0 = vector.load %arg1[%c0, %c0_0, %c0_1] : memref<1x4x256xf32, #tpu.memory_space<vmem>>, vector<1x4x256xf32>
    %1 = vector.shape_cast %0 : vector<1x4x256xf32> to vector<4x256xf32>
    %2 = vector.extract_strided_slice %1 {offsets = [0, 239], sizes = [4, 17], strides = [1, 1]} : vector<4x256xf32> to vector<4x17xf32>
    %3 = vector.extract_strided_slice %1 {offsets = [0, 0], sizes = [4, 239], strides = [1, 1]} : vector<4x256xf32> to vector<4x239xf32>
    %4 = tpu.concatenate %2, %3 in 1 : vector<4x17xf32>, vector<4x239xf32> -> vector<4x256xf32>
    %c0_2 = arith.constant 0 : index
    %c0_3 = arith.constant 0 : index
    %5 = vector.load %arg2[%c0_2, %c0_3] : memref<9x256xf32, #tpu.memory_space<vmem>>, vector<1x256xf32>
    %6 = vector.broadcast %5 : vector<1x256xf32> to vector<4x256xf32>
    %7 = arith.mulf %4, %6 : vector<4x256xf32>
    %8 = vector.extract_strided_slice %1 {offsets = [0, 240], sizes = [4, 16], strides = [1, 1]} : vector<4x256xf32> to vector<4x16xf32>
    %9 = vector.extract_strided_slice %1 {offsets = [0, 0], sizes = [4, 240], strides = [1, 1]} : vector<4x256xf32> to vector<4x240xf32>
    %10 = tpu.concatenate %8, %9 in 1 : vector<4x16xf32>, vector<4x240xf32> -> vector<4x256xf32>
    %c1 = arith.constant 1 : index
    %c0_4 = arith.constant 0 : index
    %11 = vector.load %arg2[%c1, %c0_4] : memref<9x256xf32, #tpu.memory_space<vmem>>, vector<1x256xf32>
    %12 = vector.broadcast %11 : vector<1x256xf32> to vector<4x256xf32>
    %13 = arith.mulf %10, %12 : vector<4x256xf32>
    %14 = vector.extract_strided_slice %1 {offsets = [0, 241], sizes = [4, 15], strides = [1, 1]} : vector<4x256xf32> to vector<4x15xf32>
    %15 = vector.extract_strided_slice %1 {offsets = [0, 0], sizes = [4, 241], strides = [1, 1]} : vector<4x256xf32> to vector<4x241xf32>
    %16 = tpu.concatenate %14, %15 in 1 : vector<4x15xf32>, vector<4x241xf32> -> vector<4x256xf32>
    %c2 = arith.constant 2 : index
    %c0_5 = arith.constant 0 : index
    %17 = vector.load %arg2[%c2, %c0_5] : memref<9x256xf32, #tpu.memory_space<vmem>>, vector<1x256xf32>
    %18 = vector.broadcast %17 : vector<1x256xf32> to vector<4x256xf32>
    %19 = arith.mulf %16, %18 : vector<4x256xf32>
    %20 = vector.extract_strided_slice %1 {offsets = [0, 255], sizes = [4, 1], strides = [1, 1]} : vector<4x256xf32> to vector<4x1xf32>
    %21 = vector.extract_strided_slice %1 {offsets = [0, 0], sizes = [4, 255], strides = [1, 1]} : vector<4x256xf32> to vector<4x255xf32>
    %22 = tpu.concatenate %20, %21 in 1 : vector<4x1xf32>, vector<4x255xf32> -> vector<4x256xf32>
    %c3 = arith.constant 3 : index
    %c0_6 = arith.constant 0 : index
    %23 = vector.load %arg2[%c3, %c0_6] : memref<9x256xf32, #tpu.memory_space<vmem>>, vector<1x256xf32>
    %24 = vector.broadcast %23 : vector<1x256xf32> to vector<4x256xf32>
    %25 = arith.mulf %22, %24 : vector<4x256xf32>
    %c4 = arith.constant 4 : index
    %c0_7 = arith.constant 0 : index
    %26 = vector.load %arg2[%c4, %c0_7] : memref<9x256xf32, #tpu.memory_space<vmem>>, vector<1x256xf32>
    %27 = vector.broadcast %26 : vector<1x256xf32> to vector<4x256xf32>
    %28 = arith.mulf %1, %27 : vector<4x256xf32>
    %29 = vector.extract_strided_slice %1 {offsets = [0, 1], sizes = [4, 255], strides = [1, 1]} : vector<4x256xf32> to vector<4x255xf32>
    %30 = vector.extract_strided_slice %1 {offsets = [0, 0], sizes = [4, 1], strides = [1, 1]} : vector<4x256xf32> to vector<4x1xf32>
    %31 = tpu.concatenate %29, %30 in 1 : vector<4x255xf32>, vector<4x1xf32> -> vector<4x256xf32>
    %c5 = arith.constant 5 : index
    %c0_8 = arith.constant 0 : index
    %32 = vector.load %arg2[%c5, %c0_8] : memref<9x256xf32, #tpu.memory_space<vmem>>, vector<1x256xf32>
    %33 = vector.broadcast %32 : vector<1x256xf32> to vector<4x256xf32>
    %34 = arith.mulf %31, %33 : vector<4x256xf32>
    %35 = vector.extract_strided_slice %1 {offsets = [0, 15], sizes = [4, 241], strides = [1, 1]} : vector<4x256xf32> to vector<4x241xf32>
    %36 = vector.extract_strided_slice %1 {offsets = [0, 0], sizes = [4, 15], strides = [1, 1]} : vector<4x256xf32> to vector<4x15xf32>
    %37 = tpu.concatenate %35, %36 in 1 : vector<4x241xf32>, vector<4x15xf32> -> vector<4x256xf32>
    %c6 = arith.constant 6 : index
    %c0_9 = arith.constant 0 : index
    %38 = vector.load %arg2[%c6, %c0_9] : memref<9x256xf32, #tpu.memory_space<vmem>>, vector<1x256xf32>
    %39 = vector.broadcast %38 : vector<1x256xf32> to vector<4x256xf32>
    %40 = arith.mulf %37, %39 : vector<4x256xf32>
    %41 = vector.extract_strided_slice %1 {offsets = [0, 16], sizes = [4, 240], strides = [1, 1]} : vector<4x256xf32> to vector<4x240xf32>
    %42 = vector.extract_strided_slice %1 {offsets = [0, 0], sizes = [4, 16], strides = [1, 1]} : vector<4x256xf32> to vector<4x16xf32>
    %43 = tpu.concatenate %41, %42 in 1 : vector<4x240xf32>, vector<4x16xf32> -> vector<4x256xf32>
    %c7 = arith.constant 7 : index
    %c0_10 = arith.constant 0 : index
    %44 = vector.load %arg2[%c7, %c0_10] : memref<9x256xf32, #tpu.memory_space<vmem>>, vector<1x256xf32>
    %45 = vector.broadcast %44 : vector<1x256xf32> to vector<4x256xf32>
    %46 = arith.mulf %43, %45 : vector<4x256xf32>
    %47 = vector.extract_strided_slice %1 {offsets = [0, 17], sizes = [4, 239], strides = [1, 1]} : vector<4x256xf32> to vector<4x239xf32>
    %48 = vector.extract_strided_slice %1 {offsets = [0, 0], sizes = [4, 17], strides = [1, 1]} : vector<4x256xf32> to vector<4x17xf32>
    %49 = tpu.concatenate %47, %48 in 1 : vector<4x239xf32>, vector<4x17xf32> -> vector<4x256xf32>
    %c8 = arith.constant 8 : index
    %c0_11 = arith.constant 0 : index
    %50 = vector.load %arg2[%c8, %c0_11] : memref<9x256xf32, #tpu.memory_space<vmem>>, vector<1x256xf32>
    %51 = vector.broadcast %50 : vector<1x256xf32> to vector<4x256xf32>
    %52 = arith.mulf %49, %51 : vector<4x256xf32>
    %53 = tpu.concatenate %7, %13, %19, %25, %28, %34, %40, %46, %52 in 0 : vector<4x256xf32>, vector<4x256xf32>, vector<4x256xf32>, vector<4x256xf32>, vector<4x256xf32>, vector<4x256xf32>, vector<4x256xf32>, vector<4x256xf32>, vector<4x256xf32> -> vector<36x256xf32>
    %c0_12 = arith.constant 0 : index
    %c0_13 = arith.constant 0 : index
    %54 = vector.load %arg3[%c0_12, %c0_13] : memref<4x36xf32, #tpu.memory_space<vmem>>, vector<4x36xf32>
    %cst = arith.constant dense<0.000000e+00> : vector<4x256xf32>
    %55 = tpu.matmul %54, %53, %cst {dimension_numbers = #tpu.dot_dimension_numbers<[1], [0], [0], [1], [0, 0, 1, 1], [], []>} : vector<4x36xf32>, vector<36x256xf32>, vector<4x256xf32> -> vector<4x256xf32>
    %cst_14 = arith.constant dense<0.000000e+00> : vector<4xf32>
    %56 = vector.multi_reduction <add>, %55, %cst_14 [1] : vector<4x256xf32> to vector<4xf32>
    %57 = vector.shape_cast %56 : vector<4xf32> to vector<4x1xf32>
    %cst_15 = arith.constant 2.560000e+02 : f32
    %58 = vector.broadcast %cst_15 : f32 to vector<4x1xf32>
    %59 = arith.divf %57, %58 : vector<4x1xf32>
    %60 = vector.broadcast %59 : vector<4x1xf32> to vector<4x256xf32>
    %61 = arith.subf %55, %60 : vector<4x256xf32>
    %62 = arith.mulf %61, %61 : vector<4x256xf32>
    %cst_16 = arith.constant dense<0.000000e+00> : vector<4xf32>
    %63 = vector.multi_reduction <add>, %62, %cst_16 [1] : vector<4x256xf32> to vector<4xf32>
    %64 = vector.shape_cast %63 : vector<4xf32> to vector<4x1xf32>
    %cst_17 = arith.constant 2.560000e+02 : f32
    %65 = vector.broadcast %cst_17 : f32 to vector<4x1xf32>
    %66 = arith.divf %64, %65 : vector<4x1xf32>
    %67 = vector.broadcast %59 : vector<4x1xf32> to vector<4x256xf32>
    %68 = arith.subf %55, %67 : vector<4x256xf32>
    %cst_18 = arith.constant 9.99999974E-6 : f32
    %69 = vector.broadcast %cst_18 : f32 to vector<4x1xf32>
    %70 = arith.addf %66, %69 : vector<4x1xf32>
    %71 = math.rsqrt %70 : vector<4x1xf32>
    %72 = vector.broadcast %71 : vector<4x1xf32> to vector<4x256xf32>
    %73 = arith.mulf %68, %72 : vector<4x256xf32>
    %c0_19 = arith.constant 0 : index
    %c0_20 = arith.constant 0 : index
    %74 = vector.load %arg4[%c0_19, %c0_20] : memref<4x1xf32, #tpu.memory_space<vmem>>, vector<4x1xf32>
    %75 = vector.broadcast %74 : vector<4x1xf32> to vector<4x256xf32>
    %76 = arith.mulf %73, %75 : vector<4x256xf32>
    %c0_21 = arith.constant 0 : index
    %c0_22 = arith.constant 0 : index
    %77 = vector.load %arg5[%c0_21, %c0_22] : memref<4x1xf32, #tpu.memory_space<vmem>>, vector<4x1xf32>
    %78 = vector.broadcast %77 : vector<4x1xf32> to vector<4x256xf32>
    %79 = arith.addf %76, %78 : vector<4x256xf32>
    %cst_23 = arith.constant 0.000000e+00 : f32
    %80 = vector.broadcast %cst_23 : f32 to vector<4x256xf32>
    %81 = arith.maximumf %79, %80 : vector<4x256xf32>
    %82 = vector.extract_strided_slice %81 {offsets = [0, 239], sizes = [4, 17], strides = [1, 1]} : vector<4x256xf32> to vector<4x17xf32>
    %83 = vector.extract_strided_slice %81 {offsets = [0, 0], sizes = [4, 239], strides = [1, 1]} : vector<4x256xf32> to vector<4x239xf32>
    %84 = tpu.concatenate %82, %83 in 1 : vector<4x17xf32>, vector<4x239xf32> -> vector<4x256xf32>
    %c0_24 = arith.constant 0 : index
    %c0_25 = arith.constant 0 : index
    %85 = vector.load %arg2[%c0_24, %c0_25] : memref<9x256xf32, #tpu.memory_space<vmem>>, vector<1x256xf32>
    %86 = vector.broadcast %85 : vector<1x256xf32> to vector<4x256xf32>
    %87 = arith.mulf %84, %86 : vector<4x256xf32>
    %88 = vector.extract_strided_slice %81 {offsets = [0, 240], sizes = [4, 16], strides = [1, 1]} : vector<4x256xf32> to vector<4x16xf32>
    %89 = vector.extract_strided_slice %81 {offsets = [0, 0], sizes = [4, 240], strides = [1, 1]} : vector<4x256xf32> to vector<4x240xf32>
    %90 = tpu.concatenate %88, %89 in 1 : vector<4x16xf32>, vector<4x240xf32> -> vector<4x256xf32>
    %c1_26 = arith.constant 1 : index
    %c0_27 = arith.constant 0 : index
    %91 = vector.load %arg2[%c1_26, %c0_27] : memref<9x256xf32, #tpu.memory_space<vmem>>, vector<1x256xf32>
    %92 = vector.broadcast %91 : vector<1x256xf32> to vector<4x256xf32>
    %93 = arith.mulf %90, %92 : vector<4x256xf32>
    %94 = vector.extract_strided_slice %81 {offsets = [0, 241], sizes = [4, 15], strides = [1, 1]} : vector<4x256xf32> to vector<4x15xf32>
    %95 = vector.extract_strided_slice %81 {offsets = [0, 0], sizes = [4, 241], strides = [1, 1]} : vector<4x256xf32> to vector<4x241xf32>
    %96 = tpu.concatenate %94, %95 in 1 : vector<4x15xf32>, vector<4x241xf32> -> vector<4x256xf32>
    %c2_28 = arith.constant 2 : index
    %c0_29 = arith.constant 0 : index
    %97 = vector.load %arg2[%c2_28, %c0_29] : memref<9x256xf32, #tpu.memory_space<vmem>>, vector<1x256xf32>
    %98 = vector.broadcast %97 : vector<1x256xf32> to vector<4x256xf32>
    %99 = arith.mulf %96, %98 : vector<4x256xf32>
    %100 = vector.extract_strided_slice %81 {offsets = [0, 255], sizes = [4, 1], strides = [1, 1]} : vector<4x256xf32> to vector<4x1xf32>
    %101 = vector.extract_strided_slice %81 {offsets = [0, 0], sizes = [4, 255], strides = [1, 1]} : vector<4x256xf32> to vector<4x255xf32>
    %102 = tpu.concatenate %100, %101 in 1 : vector<4x1xf32>, vector<4x255xf32> -> vector<4x256xf32>
    %c3_30 = arith.constant 3 : index
    %c0_31 = arith.constant 0 : index
    %103 = vector.load %arg2[%c3_30, %c0_31] : memref<9x256xf32, #tpu.memory_space<vmem>>, vector<1x256xf32>
    %104 = vector.broadcast %103 : vector<1x256xf32> to vector<4x256xf32>
    %105 = arith.mulf %102, %104 : vector<4x256xf32>
    %c4_32 = arith.constant 4 : index
    %c0_33 = arith.constant 0 : index
    %106 = vector.load %arg2[%c4_32, %c0_33] : memref<9x256xf32, #tpu.memory_space<vmem>>, vector<1x256xf32>
    %107 = vector.broadcast %106 : vector<1x256xf32> to vector<4x256xf32>
    %108 = arith.mulf %81, %107 : vector<4x256xf32>
    %109 = vector.extract_strided_slice %81 {offsets = [0, 1], sizes = [4, 255], strides = [1, 1]} : vector<4x256xf32> to vector<4x255xf32>
    %110 = vector.extract_strided_slice %81 {offsets = [0, 0], sizes = [4, 1], strides = [1, 1]} : vector<4x256xf32> to vector<4x1xf32>
    %111 = tpu.concatenate %109, %110 in 1 : vector<4x255xf32>, vector<4x1xf32> -> vector<4x256xf32>
    %c5_34 = arith.constant 5 : index
    %c0_35 = arith.constant 0 : index
    %112 = vector.load %arg2[%c5_34, %c0_35] : memref<9x256xf32, #tpu.memory_space<vmem>>, vector<1x256xf32>
    %113 = vector.broadcast %112 : vector<1x256xf32> to vector<4x256xf32>
    %114 = arith.mulf %111, %113 : vector<4x256xf32>
    %115 = vector.extract_strided_slice %81 {offsets = [0, 15], sizes = [4, 241], strides = [1, 1]} : vector<4x256xf32> to vector<4x241xf32>
    %116 = vector.extract_strided_slice %81 {offsets = [0, 0], sizes = [4, 15], strides = [1, 1]} : vector<4x256xf32> to vector<4x15xf32>
    %117 = tpu.concatenate %115, %116 in 1 : vector<4x241xf32>, vector<4x15xf32> -> vector<4x256xf32>
    %c6_36 = arith.constant 6 : index
    %c0_37 = arith.constant 0 : index
    %118 = vector.load %arg2[%c6_36, %c0_37] : memref<9x256xf32, #tpu.memory_space<vmem>>, vector<1x256xf32>
    %119 = vector.broadcast %118 : vector<1x256xf32> to vector<4x256xf32>
    %120 = arith.mulf %117, %119 : vector<4x256xf32>
    %121 = vector.extract_strided_slice %81 {offsets = [0, 16], sizes = [4, 240], strides = [1, 1]} : vector<4x256xf32> to vector<4x240xf32>
    %122 = vector.extract_strided_slice %81 {offsets = [0, 0], sizes = [4, 16], strides = [1, 1]} : vector<4x256xf32> to vector<4x16xf32>
    %123 = tpu.concatenate %121, %122 in 1 : vector<4x240xf32>, vector<4x16xf32> -> vector<4x256xf32>
    %c7_38 = arith.constant 7 : index
    %c0_39 = arith.constant 0 : index
    %124 = vector.load %arg2[%c7_38, %c0_39] : memref<9x256xf32, #tpu.memory_space<vmem>>, vector<1x256xf32>
    %125 = vector.broadcast %124 : vector<1x256xf32> to vector<4x256xf32>
    %126 = arith.mulf %123, %125 : vector<4x256xf32>
    %127 = vector.extract_strided_slice %81 {offsets = [0, 17], sizes = [4, 239], strides = [1, 1]} : vector<4x256xf32> to vector<4x239xf32>
    %128 = vector.extract_strided_slice %81 {offsets = [0, 0], sizes = [4, 17], strides = [1, 1]} : vector<4x256xf32> to vector<4x17xf32>
    %129 = tpu.concatenate %127, %128 in 1 : vector<4x239xf32>, vector<4x17xf32> -> vector<4x256xf32>
    %c8_40 = arith.constant 8 : index
    %c0_41 = arith.constant 0 : index
    %130 = vector.load %arg2[%c8_40, %c0_41] : memref<9x256xf32, #tpu.memory_space<vmem>>, vector<1x256xf32>
    %131 = vector.broadcast %130 : vector<1x256xf32> to vector<4x256xf32>
    %132 = arith.mulf %129, %131 : vector<4x256xf32>
    %133 = tpu.concatenate %87, %93, %99, %105, %108, %114, %120, %126, %132 in 0 : vector<4x256xf32>, vector<4x256xf32>, vector<4x256xf32>, vector<4x256xf32>, vector<4x256xf32>, vector<4x256xf32>, vector<4x256xf32>, vector<4x256xf32>, vector<4x256xf32> -> vector<36x256xf32>
    %c0_42 = arith.constant 0 : index
    %c0_43 = arith.constant 0 : index
    %134 = vector.load %arg6[%c0_42, %c0_43] : memref<4x36xf32, #tpu.memory_space<vmem>>, vector<4x36xf32>
    %cst_44 = arith.constant dense<0.000000e+00> : vector<4x256xf32>
    %135 = tpu.matmul %134, %133, %cst_44 {dimension_numbers = #tpu.dot_dimension_numbers<[1], [0], [0], [1], [0, 0, 1, 1], [], []>} : vector<4x36xf32>, vector<36x256xf32>, vector<4x256xf32> -> vector<4x256xf32>
    %cst_45 = arith.constant dense<0.000000e+00> : vector<4xf32>
    %136 = vector.multi_reduction <add>, %135, %cst_45 [1] : vector<4x256xf32> to vector<4xf32>
    %137 = vector.shape_cast %136 : vector<4xf32> to vector<4x1xf32>
    %cst_46 = arith.constant 2.560000e+02 : f32
    %138 = vector.broadcast %cst_46 : f32 to vector<4x1xf32>
    %139 = arith.divf %137, %138 : vector<4x1xf32>
    %140 = vector.broadcast %139 : vector<4x1xf32> to vector<4x256xf32>
    %141 = arith.subf %135, %140 : vector<4x256xf32>
    %142 = arith.mulf %141, %141 : vector<4x256xf32>
    %cst_47 = arith.constant dense<0.000000e+00> : vector<4xf32>
    %143 = vector.multi_reduction <add>, %142, %cst_47 [1] : vector<4x256xf32> to vector<4xf32>
    %144 = vector.shape_cast %143 : vector<4xf32> to vector<4x1xf32>
    %cst_48 = arith.constant 2.560000e+02 : f32
    %145 = vector.broadcast %cst_48 : f32 to vector<4x1xf32>
    %146 = arith.divf %144, %145 : vector<4x1xf32>
    %147 = vector.broadcast %139 : vector<4x1xf32> to vector<4x256xf32>
    %148 = arith.subf %135, %147 : vector<4x256xf32>
    %cst_49 = arith.constant 9.99999974E-6 : f32
    %149 = vector.broadcast %cst_49 : f32 to vector<4x1xf32>
    %150 = arith.addf %146, %149 : vector<4x1xf32>
    %151 = math.rsqrt %150 : vector<4x1xf32>
    %152 = vector.broadcast %151 : vector<4x1xf32> to vector<4x256xf32>
    %153 = arith.mulf %148, %152 : vector<4x256xf32>
    %c0_50 = arith.constant 0 : index
    %c0_51 = arith.constant 0 : index
    %154 = vector.load %arg7[%c0_50, %c0_51] : memref<4x1xf32, #tpu.memory_space<vmem>>, vector<4x1xf32>
    %155 = vector.broadcast %154 : vector<4x1xf32> to vector<4x256xf32>
    %156 = arith.mulf %153, %155 : vector<4x256xf32>
    %c0_52 = arith.constant 0 : index
    %c0_53 = arith.constant 0 : index
    %157 = vector.load %arg8[%c0_52, %c0_53] : memref<4x1xf32, #tpu.memory_space<vmem>>, vector<4x1xf32>
    %158 = vector.broadcast %157 : vector<4x1xf32> to vector<4x256xf32>
    %159 = arith.addf %156, %158 : vector<4x256xf32>
    %160 = arith.addf %1, %159 : vector<4x256xf32>
    %c0_54 = arith.constant 0 : index
    %c0_55 = arith.constant 0 : index
    %c0_56 = arith.constant 0 : index
    %161 = vector.load %arg9[%c0_54, %c0_55, %c0_56] : memref<1x4x256xf32, #tpu.memory_space<vmem>>, vector<1x4x256xf32>
    %162 = vector.shape_cast %161 : vector<1x4x256xf32> to vector<4x256xf32>
    %163 = vector.shape_cast %160 : vector<4x256xf32> to vector<1x4x256xf32>
    tpu.vector_store %arg9[%c0_54, %c0_55, %c0_56], %163 {strides = array<i32>} : memref<1x4x256xf32, #tpu.memory_space<vmem>>, vector<1x4x256xf32>,
    return
  }
  func.func @transform_0(%arg0: i32) -> (i32, i32, i32) {
    %c0_i32 = arith.constant 0 : i32
    %c0_i32_0 = arith.constant 0 : i32
    %c0_i32_1 = arith.constant 0 : i32
    return %arg0, %c0_i32, %c0_i32_0 : i32, i32, i32
  }
  func.func @transform_1(%arg0: i32) -> (i32, i32) {
    %c0_i32 = arith.constant 0 : i32
    %c0_i32_0 = arith.constant 0 : i32
    %c0_i32_1 = arith.constant 0 : i32
    return %c0_i32, %c0_i32_0 : i32, i32
  }
  func.func @transform_2(%arg0: i32) -> (i32, i32) {
    %c0_i32 = arith.constant 0 : i32
    %c0_i32_0 = arith.constant 0 : i32
    %c0_i32_1 = arith.constant 0 : i32
    return %c0_i32, %c0_i32_0 : i32, i32
  }
  func.func @transform_3(%arg0: i32) -> (i32, i32) {
    %c0_i32 = arith.constant 0 : i32
    %c0_i32_0 = arith.constant 0 : i32
    %c0_i32_1 = arith.constant 0 : i32
    return %c0_i32, %c0_i32_0 : i32, i32
  }
  func.func @transform_4(%arg0: i32) -> (i32, i32) {
    %c0_i32 = arith.constant 0 : i32
    %c0_i32_0 = arith.constant 0 : i32
    %c0_i32_1 = arith.constant 0 : i32
    return %c0_i32, %c0_i32_0 : i32, i32
  }
  func.func @transform_5(%arg0: i32) -> (i32, i32) {
    %c0_i32 = arith.constant 0 : i32
    %c0_i32_0 = arith.constant 0 : i32
    %c0_i32_1 = arith.constant 0 : i32
    return %c0_i32, %c0_i32_0 : i32, i32
  }
  func.func @transform_6(%arg0: i32) -> (i32, i32) {
    %c0_i32 = arith.constant 0 : i32
    %c0_i32_0 = arith.constant 0 : i32
    %c0_i32_1 = arith.constant 0 : i32
    return %c0_i32, %c0_i32_0 : i32, i32
  }
  func.func @transform_7(%arg0: i32) -> (i32, i32) {
    %c0_i32 = arith.constant 0 : i32
    %c0_i32_0 = arith.constant 0 : i32
    %c0_i32_1 = arith.constant 0 : i32
    return %c0_i32, %c0_i32_0 : i32, i32
  }
  func.func @transform_8(%arg0: i32) -> (i32, i32, i32) {
    %c0_i32 = arith.constant 0 : i32
    %c0_i32_0 = arith.constant 0 : i32
    %c0_i32_1 = arith.constant 0 : i32
    return %arg0, %c0_i32, %c0_i32_0 : i32, i32, i32
  }
}

</mosaic_0001>

<llo_original>
// kernel: tpu_custom_call.1
$region0: #{tpu_custom_call.1}
  #allocation0 [shape = 'u32[]', space=smem, size = 0x4, offset = 0x4, fixed_abs, tag = 'smem constant byte address 0x4 - core index']
  #allocation1 [shape = 'u32[144,128]{1,0:T(1,128)}', space=vmem, size = 0x12000, scoped, tag = 'internal scratch']
  %s0 = inlined_call_operand.vmem [shape: f32[2,4,256], index: 0, kind: input, shape index: {}]
  %s1 = inlined_call_operand.hbm [shape: f32[9,256], index: 1, kind: input, shape index: {}]
  %s2 = inlined_call_operand.vmem [shape: f32[4,36], index: 2, kind: input, shape index: {}]
  %s3 = inlined_call_operand.vmem [shape: f32[4,1], index: 3, kind: input, shape index: {}]
  %s4 = inlined_call_operand.vmem [shape: f32[4,1], index: 4, kind: input, shape index: {}]
  %s5 = inlined_call_operand.vmem [shape: f32[4,36], index: 5, kind: input, shape index: {}]
  %s6 = inlined_call_operand.vmem [shape: f32[4,1], index: 6, kind: input, shape index: {}]
  %s7 = inlined_call_operand.vmem [shape: f32[4,1], index: 7, kind: input, shape index: {}]
  %s8 = inlined_call_operand.hbm [shape: f32[2,4,256], index: 8, kind: output, shape index: {}]
  %s9 = sld [smem:[#allocation0]]
  $region69: #{tpu_custom_call.1} parent=0
    _
  %s11 = ssub.s32 1, %s9
  %s12 = scalar_select 0, %s11, %s9
  $region1: #{tpu_custom_call.1} parent=0
    #allocation2 [shape = 'u8[16384]{0}', space=vmem, size = 0x4000, scoped, tag = 'input window, operand 1, single buffered']
    #allocation3 [shape = 's32[2]{0}', space=sflag, size = 0x8, scoped, tag = 'scoped memory for tpu_custom_call.1']
    #allocation4 [shape = 's32[2]{0}', space=sflag, size = 0x8, scoped, tag = 'scoped memory for tpu_custom_call.1']
    #allocation5 [shape = 'u8[8192]{0}', space=vmem, size = 0x2000, scoped, tag = 'output window, operand 0']
    %13 = vsyncpa [#allocation3], 0
    %14 = vsyncpa [#allocation4], 0
    %s15 = scalar_lea.sflag [#allocation4], 1
    %16 = vsyncpa %s15, 0
    loop: start=0, step=1, limit=4
    $region2: #{tpu_custom_call.1} parent=1 // loop_pre_header
      _
    $region3: #{tpu_custom_call.1} parent=1 // loop_header
      %s18 = sphi 0, %s22
      %p19 = scmp.ge.s32.totalorder %s18, 4
      %s28 = sphi 0, %s30
      %s31 = sphi 0, %s28
      %s32 = sphi 0, %s31
      %s48 = sphi 0, %s32
      %s52 = sphi 0, %s52
      %s54 = sphi 0, %s52
      %s55 = sphi 0, %s54
      %s69 = sphi 0, %s55
      %s73 = sphi 0, %s73
      %s75 = sphi 0, %s73
      %s76 = sphi 0, %s75
      %s90 = sphi 0, %s76
      %s94 = sphi 0, %s94
      %s96 = sphi 0, %s94
      %s97 = sphi 0, %s96
      %s111 = sphi 0, %s97
      %s115 = sphi 0, %s115
      %s117 = sphi 0, %s115
      %s118 = sphi 0, %s117
      %s132 = sphi 0, %s118
      %s136 = sphi 0, %s136
      %s138 = sphi 0, %s136
      %s139 = sphi 0, %s138
      %s153 = sphi 0, %s139
      %s157 = sphi 0, %s157
      %s159 = sphi 0, %s157
      %s160 = sphi 0, %s159
      %s174 = sphi 0, %s160
      %s178 = sphi 0, %s178
      %s180 = sphi 0, %s178
      %s181 = sphi 0, %s180
      %s195 = sphi 0, %s181
      %s201 = sphi 0, %s203
      %s204 = sphi 0, %s201
      %s205 = sphi 0, %s204
      %s221 = sphi 0, %s205
    $region4: #{tpu_custom_call.1} parent=1 // loop_header_branch
      %21 = sbr.rel (%p19) target = $region8
    $region5: #{tpu_custom_call.1} parent=1 // loop_body
      %s23 = ssub.s32 %s18, 1
      %s24 = ssub.s32 %s18, 2
      %s25 = sadd.s32 %s18, 1
      %s26 = ssub.s32 %s18, %s25
      %p27 = scmp.eq.s32.totalorder %s26, 0
      %s29 = sadd.s32 %s28, 1
      %s30 = scalar_select %p27, %s28, %s29
      %p33 = pneg %p27
      %p34 = scmp.eq.s32.totalorder %s18, 1
      %p35 = por %p33, %p34
      %p36 = scmp.ne.s32.totalorder %s28, %s31
      %p37 = scmp.eq.s32.totalorder %s18, 0
      %p38 = por %p36, %p37
      %p39 = scmp.ne.s32.totalorder %s28, %s31
      %p40 = scmp.eq.s32.totalorder %s23, 1
      %p41 = por %p39, %p40
      %p42 = scmp.ne.s32.totalorder %s31, %s32
      %p43 = scmp.eq.s32.totalorder %s23, 0
      %p44 = por %p42, %p43
      %p45 = scmp.ne.s32.totalorder %s31, %s32
      %p46 = scmp.eq.s32.totalorder %s24, 1
      %p47 = por %p45, %p46
      %p49 = scmp.ne.s32.totalorder %s32, %s48
      %p50 = scmp.eq.s32.totalorder %s24, 0
      %p51 = por %p49, %p50
      %s53 = sadd.s32 %s52, 1
      %p56 = scmp.eq.s32.totalorder %s18, 1
      %p57 = scmp.ne.s32.totalorder %s52, %s54
      %p58 = scmp.eq.s32.totalorder %s18, 0
      %p59 = por %p57, %p58
      %p60 = scmp.ne.s32.totalorder %s52, %s54
      %p61 = scmp.eq.s32.totalorder %s23, 1
      %p62 = por %p60, %p61
      %p63 = scmp.ne.s32.totalorder %s54, %s55
      %p64 = scmp.eq.s32.totalorder %s23, 0
      %p65 = por %p63, %p64
      %p66 = scmp.ne.s32.totalorder %s54, %s55
      %p67 = scmp.eq.s32.totalorder %s24, 1
      %p68 = por %p66, %p67
      %p70 = scmp.ne.s32.totalorder %s55, %s69
      %p71 = scmp.eq.s32.totalorder %s24, 0
      %p72 = por %p70, %p71
      %s74 = sadd.s32 %s73, 1
      %p77 = scmp.eq.s32.totalorder %s18, 1
      %p78 = scmp.ne.s32.totalorder %s73, %s75
      %p79 = scmp.eq.s32.totalorder %s18, 0
      %p80 = por %p78, %p79
      %p81 = scmp.ne.s32.totalorder %s73, %s75
      %p82 = scmp.eq.s32.totalorder %s23, 1
      %p83 = por %p81, %p82
      %p84 = scmp.ne.s32.totalorder %s75, %s76
      %p85 = scmp.eq.s32.totalorder %s23, 0
      %p86 = por %p84, %p85
      %p87 = scmp.ne.s32.totalorder %s75, %s76
      %p88 = scmp.eq.s32.totalorder %s24, 1
      %p89 = por %p87, %p88
      %p91 = scmp.ne.s32.totalorder %s76, %s90
      %p92 = scmp.eq.s32.totalorder %s24, 0
      %p93 = por %p91, %p92
      %s95 = sadd.s32 %s94, 1
      %p98 = scmp.eq.s32.totalorder %s18, 1
      %p99 = scmp.ne.s32.totalorder %s94, %s96
      %p100 = scmp.eq.s32.totalorder %s18, 0
      %p101 = por %p99, %p100
      %p102 = scmp.ne.s32.totalorder %s94, %s96
      %p103 = scmp.eq.s32.totalorder %s23, 1
      %p104 = por %p102, %p103
      %p105 = scmp.ne.s32.totalorder %s96, %s97
      %p106 = scmp.eq.s32.totalorder %s23, 0
      %p107 = por %p105, %p106
      %p108 = scmp.ne.s32.totalorder %s96, %s97
      %p109 = scmp.eq.s32.totalorder %s24, 1
      %p110 = por %p108, %p109
      %p112 = scmp.ne.s32.totalorder %s97, %s111
      %p113 = scmp.eq.s32.totalorder %s24, 0
      %p114 = por %p112, %p113
      %s116 = sadd.s32 %s115, 1
      %p119 = scmp.eq.s32.totalorder %s18, 1
      %p120 = scmp.ne.s32.totalorder %s115, %s117
      %p121 = scmp.eq.s32.totalorder %s18, 0
      %p122 = por %p120, %p121
      %p123 = scmp.ne.s32.totalorder %s115, %s117
      %p124 = scmp.eq.s32.totalorder %s23, 1
      %p125 = por %p123, %p124
      %p126 = scmp.ne.s32.totalorder %s117, %s118
      %p127 = scmp.eq.s32.totalorder %s23, 0
      %p128 = por %p126, %p127
      %p129 = scmp.ne.s32.totalorder %s117, %s118
      %p130 = scmp.eq.s32.totalorder %s24, 1
      %p131 = por %p129, %p130
      %p133 = scmp.ne.s32.totalorder %s118, %s132
      %p134 = scmp.eq.s32.totalorder %s24, 0
      %p135 = por %p133, %p134
      %s137 = sadd.s32 %s136, 1
      %p140 = scmp.eq.s32.totalorder %s18, 1
      %p141 = scmp.ne.s32.totalorder %s136, %s138
      %p142 = scmp.eq.s32.totalorder %s18, 0
      %p143 = por %p141, %p142
      %p144 = scmp.ne.s32.totalorder %s136, %s138
      %p145 = scmp.eq.s32.totalorder %s23, 1
      %p146 = por %p144, %p145
      %p147 = scmp.ne.s32.totalorder %s138, %s139
      %p148 = scmp.eq.s32.totalorder %s23, 0
      %p149 = por %p147, %p148
      %p150 = scmp.ne.s32.totalorder %s138, %s139
      %p151 = scmp.eq.s32.totalorder %s24, 1
      %p152 = por %p150, %p151
      %p154 = scmp.ne.s32.totalorder %s139, %s153
      %p155 = scmp.eq.s32.totalorder %s24, 0
      %p156 = por %p154, %p155
      %s158 = sadd.s32 %s157, 1
      %p161 = scmp.eq.s32.totalorder %s18, 1
      %p162 = scmp.ne.s32.totalorder %s157, %s159
      %p163 = scmp.eq.s32.totalorder %s18, 0
      %p164 = por %p162, %p163
      %p165 = scmp.ne.s32.totalorder %s157, %s159
      %p166 = scmp.eq.s32.totalorder %s23, 1
      %p167 = por %p165, %p166
      %p168 = scmp.ne.s32.totalorder %s159, %s160
      %p169 = scmp.eq.s32.totalorder %s23, 0
      %p170 = por %p168, %p169
      %p171 = scmp.ne.s32.totalorder %s159, %s160
      %p172 = scmp.eq.s32.totalorder %s24, 1
      %p173 = por %p171, %p172
      %p175 = scmp.ne.s32.totalorder %s160, %s174
      %p176 = scmp.eq.s32.totalorder %s24, 0
      %p177 = por %p175, %p176
      %s179 = sadd.s32 %s178, 1
      %p182 = scmp.eq.s32.totalorder %s18, 1
      %p183 = scmp.ne.s32.totalorder %s178, %s180
      %p184 = scmp.eq.s32.totalorder %s18, 0
      %p185 = por %p183, %p184
      %p186 = scmp.ne.s32.totalorder %s178, %s180
      %p187 = scmp.eq.s32.totalorder %s23, 1
      %p188 = por %p186, %p187
      %p189 = scmp.ne.s32.totalorder %s180, %s181
      %p190 = scmp.eq.s32.totalorder %s23, 0
      %p191 = por %p189, %p190
      %p192 = scmp.ne.s32.totalorder %s180, %s181
      %p193 = scmp.eq.s32.totalorder %s24, 1
      %p194 = por %p192, %p193
      %p196 = scmp.ne.s32.totalorder %s181, %s195
      %p197 = scmp.eq.s32.totalorder %s24, 0
      %p198 = por %p196, %p197
      %s199 = ssub.s32 %s18, %s25
      %p200 = scmp.eq.s32.totalorder %s199, 0
      %s202 = sadd.s32 %s201, 1
      %s203 = scalar_select %p200, %s201, %s202
      %p206 = pneg %p200
      %p207 = scmp.eq.s32.totalorder %s18, 1
      %p208 = por %p206, %p207
      %p209 = scmp.ne.s32.totalorder %s201, %s204
      %p210 = scmp.eq.s32.totalorder %s18, 0
      %p211 = por %p209, %p210
      %p212 = scmp.ne.s32.totalorder %s201, %s204
      %p213 = scmp.eq.s32.totalorder %s23, 1
      %p214 = por %p212, %p213
      %p215 = scmp.ne.s32.totalorder %s204, %s205
      %p216 = scmp.eq.s32.totalorder %s23, 0
      %p217 = por %p215, %p216
      %p218 = scmp.ne.s32.totalorder %s204, %s205
      %p219 = scmp.eq.s32.totalorder %s24, 1
      %p220 = por %p218, %p219
      %p222 = scmp.ne.s32.totalorder %s205, %s221
      %p223 = scmp.eq.s32.totalorder %s24, 0
      %p224 = por %p222, %p223
      %p225 = scmp.le.s32.totalorder 1, %s18
      %p226 = scmp.lt.s32.totalorder %s18, 3
      %p227 = pnand %p225, %p226
      %p228 = pneg %p227
      // Predicated region
      $region9: #{tpu_custom_call.1} parent=5 // pred_check
        _
      $region10: #{tpu_custom_call.1} parent=5 // pred_check_branch
        %230 = sbr.rel (%p227) target = $region12
      $region11: #{tpu_custom_call.1} parent=5 // pred_region
        %s231 = ssub.s32 %s18, 1
        // Predicated region
        $region13: #{tpu_custom_call.1} parent=11 // pred_check
          %p232 = pneg %p65
        $region14: #{tpu_custom_call.1} parent=11 // pred_check_branch
          %234 = sbr.rel (%p232) target = $region16
        $region15: #{tpu_custom_call.1} parent=11 // pred_region
          %s236 = ssub.s32 512, 512
          %237 = vsyncadd [#allocation3], %s236
          %s238 = sshll.u32 [#allocation2], 4
          %s239 = int_to_ptr.vmem [resolvable:$true] %s238
          %244 = dma.hbm_to_vmem [thread:$0]  %s1, 512, %s239, [#allocation3], 256, 256, 16
        $region16: #{tpu_custom_call.1} parent=11 // pred_fallthru
          _
        // Predicated region
        $region17: #{tpu_custom_call.1} parent=11 // pred_check
          %p245 = pneg %p86
        $region18: #{tpu_custom_call.1} parent=11 // pred_check_branch
          %247 = sbr.rel (%p245) target = $region20
        $region19: #{tpu_custom_call.1} parent=11 // pred_region
          _
        $region20: #{tpu_custom_call.1} parent=11 // pred_fallthru
          _
        // Predicated region
        $region21: #{tpu_custom_call.1} parent=11 // pred_check
          %p248 = pneg %p107
        $region22: #{tpu_custom_call.1} parent=11 // pred_check_branch
          %250 = sbr.rel (%p248) target = $region24
        $region23: #{tpu_custom_call.1} parent=11 // pred_region
          _
        $region24: #{tpu_custom_call.1} parent=11 // pred_fallthru
          _
        // Predicated region
        $region25: #{tpu_custom_call.1} parent=11 // pred_check
          %p251 = pneg %p128
        $region26: #{tpu_custom_call.1} parent=11 // pred_check_branch
          %253 = sbr.rel (%p251) target = $region28
        $region27: #{tpu_custom_call.1} parent=11 // pred_region
          _
        $region28: #{tpu_custom_call.1} parent=11 // pred_fallthru
          _
        // Predicated region
        $region29: #{tpu_custom_call.1} parent=11 // pred_check
          %p254 = pneg %p149
        $region30: #{tpu_custom_call.1} parent=11 // pred_check_branch
          %256 = sbr.rel (%p254) target = $region32
        $region31: #{tpu_custom_call.1} parent=11 // pred_region
          _
        $region32: #{tpu_custom_call.1} parent=11 // pred_fallthru
          _
        // Predicated region
        $region33: #{tpu_custom_call.1} parent=11 // pred_check
          %p257 = pneg %p170
        $region34: #{tpu_custom_call.1} parent=11 // pred_check_branch
          %259 = sbr.rel (%p257) target = $region36
        $region35: #{tpu_custom_call.1} parent=11 // pred_region
          _
        $region36: #{tpu_custom_call.1} parent=11 // pred_fallthru
          _
        // Predicated region
        $region37: #{tpu_custom_call.1} parent=11 // pred_check
          %p260 = pneg %p191
        $region38: #{tpu_custom_call.1} parent=11 // pred_check_branch
          %262 = sbr.rel (%p260) target = $region40
        $region39: #{tpu_custom_call.1} parent=11 // pred_region
          _
        $region40: #{tpu_custom_call.1} parent=11 // pred_fallthru
          _
      $region12: #{tpu_custom_call.1} parent=5 // pred_fallthru
        _
      %p263 = scmp.lt.s32.totalorder %s18, 2
      // Predicated region
      $region41: #{tpu_custom_call.1} parent=5 // pred_check
        %p264 = pneg %p263
      $region42: #{tpu_custom_call.1} parent=5 // pred_check_branch
        %266 = sbr.rel (%p264) target = $region44
      $region43: #{tpu_custom_call.1} parent=5 // pred_region
        // Predicated region
        $region45: #{tpu_custom_call.1} parent=43 // pred_check
          %p267 = pneg %p38
        $region46: #{tpu_custom_call.1} parent=43 // pred_check_branch
          %269 = sbr.rel (%p267) target = $region48
        $region47: #{tpu_custom_call.1} parent=43 // pred_region
          %p270 = scmp.lt.s32.totalorder %s18, 1
          %s271 = scalar_select %p270, %s18, 1
          %s272 = smul.addr %s271, 2
          %s273 = smul.addr %s272, 4
          %s274 = scalar_lea.vmem %s0, %s273
        $region48: #{tpu_custom_call.1} parent=43 // pred_fallthru
          _
      $region44: #{tpu_custom_call.1} parent=5 // pred_fallthru
        _
      %p275 = scmp.le.s32.totalorder 1, %s18
      %p276 = scmp.lt.s32.totalorder %s18, 3
      %p277 = pnand %p275, %p276
      %p278 = pneg %p277
      // Predicated region
      $region49: #{tpu_custom_call.1} parent=5 // pred_check
        _
      $region50: #{tpu_custom_call.1} parent=5 // pred_check_branch
        %280 = sbr.rel (%p277) target = $region52
      $region51: #{tpu_custom_call.1} parent=5 // pred_region
        %s281 = ssub.s32 %s18, 1
        // Predicated region
        $region53: #{tpu_custom_call.1} parent=51 // pred_check
          %p282 = pneg %p65
        $region54: #{tpu_custom_call.1} parent=51 // pred_check_branch
          %284 = sbr.rel (%p282) target = $region56
        $region55: #{tpu_custom_call.1} parent=51 // pred_region
          %285 = dma.done [#allocation3], 512
        $region56: #{tpu_custom_call.1} parent=51 // pred_fallthru
          _
        %p286 = scmp.lt.s32.totalorder %s23, 1
        %s287 = scalar_select %p286, %s23, 1
        %s288 = smul.addr %s287, 2
        %s289 = smul.addr %s288, 4
        %s290 = scalar_lea.vmem %s0, %s289
        %p291 = pneg %p44
        %p292 = pneg %p41
        %p293 = pneg %p65
        %p294 = pneg %p62
        %p295 = pneg %p86
        %p296 = pneg %p83
        %p297 = pneg %p107
        %p298 = pneg %p104
        %p299 = pneg %p128
        %p300 = pneg %p125
        %p301 = pneg %p149
        %p302 = pneg %p146
        %p303 = pneg %p170
        %p304 = pneg %p167
        %p305 = pneg %p191
        %p306 = pneg %p188
        %p307 = pneg %p217
        %p308 = pneg %p214
        %s309 = sand.u32 %s204, 1
        %s310 = scalar_lea.sflag [#allocation4], %s309
        %s311 = sand.u32 %s204, 1
        %s312 = smul.addr %s311, 8
        %s313 = scalar_lea.vmem [#allocation5], %s312
        %p314 = scmp.lt.s32.totalorder %s23, 1
        %s315 = scalar_select %p314, %s23, 1
        %s316 = smul.addr %s315, 2
        %s317 = smul.addr %s316, 4
        %s318 = scalar_lea.vmem %s0, %s317
        %v319 = vld [vmem:[%s318] sm:$0xff]
        %v321 = vcombine.high %v319, %v319
        %322 = vrot.lane.b32.xlu0 %v321, 17
        %v323 = vpop.permute.xlu0 %322
        %325 = vrot.lane.b32.xlu0 %v319, 17
        %v326 = vpop.permute.xlu0 %325
        %vm327 = vcmask 138240
        %v328 = vsel %vm327, %v326, %v323
        %v331 = vsel %vm327, %v323, %v326
        %v332 = vld [vmem:[#allocation2] ss:$8 sm:$0x3]
        %v334 = vlaneseq
        %v335 = vshrl.u32 %v334, 7
        %v336 = vsub.s32 0, %v335
        %v337 = vrot.slane %v332, %v336
        %v338 = vlaneseq
        %v339 = vshrl.u32 %v338, 7
        %v340 = vsub.s32 1, %v339
        %v341 = vrot.slane %v332, %v340
        %v344 = vmul.f32 %v331, %v337
        %v345 = vmul.f32 %v328, %v341
        %346 = vrot.lane.b32.xlu0 %v321, 16
        %v347 = vpop.permute.xlu0 %346
        %349 = vrot.lane.b32.xlu0 %v319, 16
        %v350 = vpop.permute.xlu0 %349
        %vm351 = vcmask 130048
        %v352 = vsel %vm351, %v350, %v347
        %v355 = vsel %vm351, %v347, %v350
        %s356 = scalar_lea.vmem [#allocation2], 1
        %v357 = vld [vmem:[%s356] ss:$8 sm:$0x3]
        %v359 = vlaneseq
        %v360 = vshrl.u32 %v359, 7
        %v361 = vsub.s32 0, %v360
        %v362 = vrot.slane %v357, %v361
        %v363 = vlaneseq
        %v364 = vshrl.u32 %v363, 7
        %v365 = vsub.s32 1, %v364
        %v366 = vrot.slane %v357, %v365
        %v369 = vmul.f32 %v355, %v362
        %v370 = vmul.f32 %v352, %v366
        %371 = vrot.lane.b32.xlu0 %v321, 15
        %v372 = vpop.permute.xlu0 %371
        %374 = vrot.lane.b32.xlu0 %v319, 15
        %v375 = vpop.permute.xlu0 %374
        %vm376 = vcmask 121856
        %v377 = vsel %vm376, %v375, %v372
        %v380 = vsel %vm376, %v372, %v375
        %s381 = scalar_lea.vmem [#allocation2], 2
        %v382 = vld [vmem:[%s381] ss:$8 sm:$0x3]
        %v384 = vlaneseq
        %v385 = vshrl.u32 %v384, 7
        %v386 = vsub.s32 0, %v385
        %v387 = vrot.slane %v382, %v386
        %v388 = vlaneseq
        %v389 = vshrl.u32 %v388, 7
        %v390 = vsub.s32 1, %v389
        %v391 = vrot.slane %v382, %v390
        %v394 = vmul.f32 %v380, %v387
        %v395 = vmul.f32 %v377, %v391
        %396 = vrot.lane.b32.xlu0 %v321, 1
        %v397 = vpop.permute.xlu0 %396
        %399 = vrot.lane.b32.xlu0 %v319, 1
        %v400 = vpop.permute.xlu0 %399
        %vm401 = vcmask 7168
        %v402 = vsel %vm401, %v400, %v397
        %v405 = vsel %vm401, %v397, %v400
        %s406 = scalar_lea.vmem [#allocation2], 3
        %v407 = vld [vmem:[%s406] ss:$8 sm:$0x3]
        %v409 = vlaneseq
        %v410 = vshrl.u32 %v409, 7
        %v411 = vsub.s32 0, %v410
        %v412 = vrot.slane %v407, %v411
        %v413 = vlaneseq
        %v414 = vshrl.u32 %v413, 7
        %v415 = vsub.s32 1, %v414
        %v416 = vrot.slane %v407, %v415
        %v419 = vmul.f32 %v405, %v412
        %v420 = vmul.f32 %v402, %v416
        %s421 = scalar_lea.vmem [#allocation2], 4
        %v422 = vld [vmem:[%s421] ss:$8 sm:$0x3]
        %v424 = vlaneseq
        %v425 = vshrl.u32 %v424, 7
        %v426 = vsub.s32 0, %v425
        %v427 = vrot.slane %v422, %v426
        %v428 = vlaneseq
        %v429 = vshrl.u32 %v428, 7
        %v430 = vsub.s32 1, %v429
        %v431 = vrot.slane %v422, %v430
        %v434 = vcombine.low %v427, %v431
        %v436 = vmul.f32 %v319, %v434
        %437 = vrot.lane.b32.xlu0 %v319, 127
        %v438 = vpop.permute.xlu0 %437
        %439 = vrot.lane.b32.xlu0 %v321, 127
        %v440 = vpop.permute.xlu0 %439
        %vm441 = vcmask 1039360
        %v442 = vsel %vm441, %v438, %v440
        %v446 = vsel %vm441, %v440, %v438
        %s447 = scalar_lea.vmem [#allocation2], 5
        %v448 = vld [vmem:[%s447] ss:$8 sm:$0x3]
        %v450 = vlaneseq
        %v451 = vshrl.u32 %v450, 7
        %v452 = vsub.s32 0, %v451
        %v453 = vrot.slane %v448, %v452
        %v454 = vlaneseq
        %v455 = vshrl.u32 %v454, 7
        %v456 = vsub.s32 1, %v455
        %v457 = vrot.slane %v448, %v456
        %v460 = vmul.f32 %v442, %v453
        %v461 = vmul.f32 %v446, %v457
        %462 = vrot.lane.b32.xlu0 %v319, 113
        %v463 = vpop.permute.xlu0 %462
        %464 = vrot.lane.b32.xlu0 %v321, 113
        %v465 = vpop.permute.xlu0 %464
        %vm466 = vcmask 924672
        %v467 = vsel %vm466, %v463, %v465
        %v471 = vsel %vm466, %v465, %v463
        %s472 = scalar_lea.vmem [#allocation2], 6
        %v473 = vld [vmem:[%s472] ss:$8 sm:$0x3]
        %v475 = vlaneseq
        %v476 = vshrl.u32 %v475, 7
        %v477 = vsub.s32 0, %v476
        %v478 = vrot.slane %v473, %v477
        %v479 = vlaneseq
        %v480 = vshrl.u32 %v479, 7
        %v481 = vsub.s32 1, %v480
        %v482 = vrot.slane %v473, %v481
        %v485 = vmul.f32 %v467, %v478
        %v486 = vmul.f32 %v471, %v482
        %487 = vrot.lane.b32.xlu0 %v319, 112
        %v488 = vpop.permute.xlu0 %487
        %489 = vrot.lane.b32.xlu0 %v321, 112
        %v490 = vpop.permute.xlu0 %489
        %vm491 = vcmask 916480
        %v492 = vsel %vm491, %v488, %v490
        %v496 = vsel %vm491, %v490, %v488
        %s497 = scalar_lea.vmem [#allocation2], 7
        %v498 = vld [vmem:[%s497] ss:$8 sm:$0x3]
        %v500 = vlaneseq
        %v501 = vshrl.u32 %v500, 7
        %v502 = vsub.s32 0, %v501
        %v503 = vrot.slane %v498, %v502
        %v504 = vlaneseq
        %v505 = vshrl.u32 %v504, 7
        %v506 = vsub.s32 1, %v505
        %v507 = vrot.slane %v498, %v506
        %v510 = vmul.f32 %v492, %v503
        %v511 = vmul.f32 %v496, %v507
        %512 = vrot.lane.b32.xlu0 %v319, 111
        %v513 = vpop.permute.xlu0 %512
        %514 = vrot.lane.b32.xlu0 %v321, 111
        %v515 = vpop.permute.xlu0 %514
        %vm516 = vcmask 908288
        %v517 = vsel %vm516, %v513, %v515
        %v521 = vsel %vm516, %v515, %v513
        %s522 = scalar_lea.vmem [#allocation2], 16
        %v523 = vld [vmem:[%s522] ss:$8 sm:$0x3]
        %v525 = vlaneseq
        %v526 = vshrl.u32 %v525, 7
        %v527 = vsub.s32 0, %v526
        %v528 = vrot.slane %v523, %v527
        %v529 = vlaneseq
        %v530 = vshrl.u32 %v529, 7
        %v531 = vsub.s32 1, %v530
        %v532 = vrot.slane %v523, %v531
        %v535 = vmul.f32 %v517, %v528
        %v536 = vmul.f32 %v521, %v532
        %v539 = vrot.slane %v369, 4
        %v540 = vrot.slane %v370, 4
        %v545 = vrot.slane %v419, 4
        %v546 = vrot.slane %v420, 4
        %v550 = vcombine.high %v436, %v436
        %v554 = vrot.slane %v460, 4
        %v555 = vrot.slane %v461, 4
        %v560 = vrot.slane %v510, 4
        %v561 = vrot.slane %v511, 4
        %vm564 = vcmask 1043456
        %v565 = vsel %vm564, %v344, %v539
        %v566 = vsel %vm564, %v345, %v540
        %v567 = vsel %vm564, %v394, %v545
        %v568 = vsel %vm564, %v395, %v546
        %v569 = vsel %vm564, %v436, %v554
        %v570 = vsel %vm564, %v550, %v555
        %v571 = vsel %vm564, %v485, %v560
        %v572 = vsel %vm564, %v486, %v561
        %v573 = vld [vmem:[%s2] sm:$0xf]
        %vm574 = vcmask 293888
        %v576 = vsel %vm574, %v573, 0
        %v579 = vsel %vm564, %v535, 0
        %v582 = vsel %vm564, %v536, 0
        %584 = vmatprep.subr.mxu0 %v566
        %585 = vmatpush1.msra.mxu0 %v565
        %586 = vmatprep.subr.mxu0 %v568
        %587 = vmatpush1.msra.mxu0 %v567
        %588 = vmatprep.subr.mxu0 %v570
        %589 = vmatpush1.msra.mxu0 %v569
        %590 = vmatprep.subr.mxu0 %v572
        %591 = vmatpush1.msra.mxu0 %v571
        %592 = vmatprep.subr.mxu0 %v582
        %593 = vmatpush1.msra.mxu0 %v579
        %594 = vmatprep.subr.mxu0 0.0
        %595 = vmatpush1.msra.mxu0 0.0
        %596 = vmatprep.subr.mxu0 0.0
        %597 = vmatpush1.msra.mxu0 0.0
        %598 = vmatprep.subr.mxu0 0.0
        %599 = vmatpush1.msra.mxu0 0.0
        %600 = vmatprep.subr.mxu0 0.0
        %601 = vmatpush1.msra.mxu0 0.0
        %602 = vmatprep.subr.mxu0 0.0
        %603 = vmatpush1.msra.mxu0 0.0
        %604 = vmatprep.subr.mxu0 0.0
        %605 = vmatpush1.msra.mxu0 0.0
        %606 = vmatprep.subr.mxu0 0.0
        %607 = vmatpush1.msra.mxu0 0.0
        %608 = vmatprep.subr.mxu0 0.0
        %609 = vmatpush1.msra.mxu0 0.0
        %610 = vmatprep.subr.mxu0 0.0
        %611 = vmatpush1.msra.mxu0 0.0
        %612 = vmatprep.subr.mxu0 0.0
        %613 = vmatpush1.msra.mxu0 0.0
        %614 = vmatprep.subr.mxu0 0.0
        %615 = vmatpush1.msra.mxu0 0.0
        %616 = vmatprep.subr.mxu0 0.0
        %617 = vmatpush1.msra.mxu0 0.0
        %618 = vmatprep.subr.mxu0 0.0
        %619 = vmatpush1.msra.mxu0 0.0
        %620 = vmatprep.subr.mxu0 0.0
        %621 = vmatpush1.msra.mxu0 0.0
        %622 = vmatprep.subr.mxu0 0.0
        %623 = vmatpush1.msra.mxu0 0.0
        %624 = vmatprep.subr.mxu0 0.0
        %625 = vmatpush1.msra.mxu0 0.0
        %626 = vmatprep.subr.mxu0 0.0
        %627 = vmatpush1.msra.mxu0 0.0
        %628 = vmatprep.subr.mxu0 0.0
        %629 = vmatpush1.msra.mxu0 0.0
        %630 = vmatprep.subr.mxu0 0.0
        %631 = vmatpush1.msra.mxu0 0.0
        %632 = vmatprep.subr.mxu0 0.0
        %633 = vmatpush1.msra.mxu0 0.0
        %634 = vmatprep.subr.mxu0 0.0
        %635 = vmatpush1.msra.mxu0 0.0
        %636 = vmatprep.subr.mxu0 0.0
        %637 = vmatpush1.msra.mxu0 0.0
        %638 = vmatprep.subr.mxu0 0.0
        %639 = vmatpush1.msra.mxu0 0.0
        %640 = vmatprep.subr.mxu0 0.0
        %641 = vmatpush1.msra.mxu0 0.0
        %642 = vmatprep.subr.mxu0 0.0
        %643 = vmatpush1.msra.mxu0 0.0
        %644 = vmatprep.subr.mxu0 0.0
        %645 = vmatpush1.msra.mxu0 0.0
        %646 = vmatprep.subr.mxu0 0.0
        %647 = vmatpush1.msra.mxu0 0.0
        %648 = vmatprep.mubr.f32.mxu0 0.0
        %649 = vmatmul.mubr.f32.gmra.mrb[0].mxu0 %v576
        %v650 = vpop.f32.mrb[0].mxu0
        %v651 = vadd.f32 0.0, %v650
        %v652 = vpop.f32.mrb[0].mxu0
        %v653 = vadd.f32 0.0, %v652
        %654 = vdwg.mxu0
        %v655 = vsel %vm564, %v651, 0.0
        %v656 = vsel %vm564, %v653, 0.0
        %v657 = vadd.f32 %v655, %v656
        %658 = vadd.xlane.f32.xlu0 %v657
        %v659 = vpop.xlane.xlu0 %658
        %v660 = vrcp.pop 256.0
        %v661 = vmul.f32 %v659, %v660
        %v662 = vsub.f32 %v651, %v661
        %v663 = vsub.f32 %v653, %v661
        %v664 = vmul.f32 %v662, %v662
        %v665 = vmul.f32 %v663, %v663
        %v666 = vsel %vm564, %v664, 0.0
        %v667 = vsel %vm564, %v665, 0.0
        %v668 = vadd.f32 %v666, %v667
        %669 = vadd.xlane.f32.xlu0 %v668
        %v670 = vpop.xlane.xlu0 %669
        %v671 = vmul.f32 %v670, %v660
        %v672 = vadd.f32 %v671, 1e-05
        %v673 = vrsqrt.pop %v672
        %v674 = vmul.f32 %v662, %v673
        %v675 = vmul.f32 %v663, %v673
        %v676 = vld [vmem:[%s3] sm:$0xf]
        %678 = vset.pattern.permute.xlu0 0
        %679 = vperm.xlu0 %678, %v676
        %v680 = vpop.permute.xlu0 %679
        %v682 = vmul.f32 %v674, %v680
        %v683 = vmul.f32 %v675, %v680
        %v684 = vld [vmem:[%s4] sm:$0xf]
        %686 = vset.pattern.permute.xlu0 0
        %687 = vperm.xlu0 %686, %v684
        %v688 = vpop.permute.xlu0 %687
        %v690 = vadd.f32 %v682, %v688
        %v691 = vadd.f32 %v683, %v688
        %v692 = vmax.f32 %v690, 0.0
        %v693 = vmax.f32 %v691, 0.0
        %695 = vrot.lane.b32.xlu0 %v693, 17
        %v696 = vpop.permute.xlu0 %695
        %699 = vrot.lane.b32.xlu0 %v692, 17
        %v700 = vpop.permute.xlu0 %699
        %v701 = vsel %vm327, %v700, %v696
        %v704 = vsel %vm327, %v696, %v700
        %v705 = vmul.f32 %v704, %v337
        %v706 = vmul.f32 %v701, %v341
        %707 = vrot.lane.b32.xlu0 %v693, 16
        %v708 = vpop.permute.xlu0 %707
        %710 = vrot.lane.b32.xlu0 %v692, 16
        %v711 = vpop.permute.xlu0 %710
        %v712 = vsel %vm351, %v711, %v708
        %v715 = vsel %vm351, %v708, %v711
        %v716 = vmul.f32 %v715, %v362
        %v717 = vmul.f32 %v712, %v366
        %718 = vrot.lane.b32.xlu0 %v693, 15
        %v719 = vpop.permute.xlu0 %718
        %721 = vrot.lane.b32.xlu0 %v692, 15
        %v722 = vpop.permute.xlu0 %721
        %v723 = vsel %vm376, %v722, %v719
        %v726 = vsel %vm376, %v719, %v722
        %v727 = vmul.f32 %v726, %v387
        %v728 = vmul.f32 %v723, %v391
        %729 = vrot.lane.b32.xlu0 %v693, 1
        %v730 = vpop.permute.xlu0 %729
        %732 = vrot.lane.b32.xlu0 %v692, 1
        %v733 = vpop.permute.xlu0 %732
        %v734 = vsel %vm401, %v733, %v730
        %v737 = vsel %vm401, %v730, %v733
        %v738 = vmul.f32 %v737, %v412
        %v739 = vmul.f32 %v734, %v416
        %v740 = vmul.f32 %v692, %v427
        %v741 = vmul.f32 %v693, %v431
        %742 = vrot.lane.b32.xlu0 %v692, 127
        %v743 = vpop.permute.xlu0 %742
        %744 = vrot.lane.b32.xlu0 %v693, 127
        %v745 = vpop.permute.xlu0 %744
        %v746 = vsel %vm441, %v743, %v745
        %v750 = vsel %vm441, %v745, %v743
        %v751 = vmul.f32 %v746, %v453
        %v752 = vmul.f32 %v750, %v457
        %753 = vrot.lane.b32.xlu0 %v692, 113
        %v754 = vpop.permute.xlu0 %753
        %755 = vrot.lane.b32.xlu0 %v693, 113
        %v756 = vpop.permute.xlu0 %755
        %v757 = vsel %vm466, %v754, %v756
        %v761 = vsel %vm466, %v756, %v754
        %v762 = vmul.f32 %v757, %v478
        %v763 = vmul.f32 %v761, %v482
        %764 = vrot.lane.b32.xlu0 %v692, 112
        %v765 = vpop.permute.xlu0 %764
        %766 = vrot.lane.b32.xlu0 %v693, 112
        %v767 = vpop.permute.xlu0 %766
        %v768 = vsel %vm491, %v765, %v767
        %v772 = vsel %vm491, %v767, %v765
        %v773 = vmul.f32 %v768, %v503
        %v774 = vmul.f32 %v772, %v507
        %775 = vrot.lane.b32.xlu0 %v692, 111
        %v776 = vpop.permute.xlu0 %775
        %777 = vrot.lane.b32.xlu0 %v693, 111
        %v778 = vpop.permute.xlu0 %777
        %v779 = vsel %vm516, %v776, %v778
        %v783 = vsel %vm516, %v778, %v776
        %v784 = vmul.f32 %v779, %v528
        %v785 = vmul.f32 %v783, %v532
        %v788 = vrot.slane %v716, 4
        %v789 = vrot.slane %v717, 4
        %v794 = vrot.slane %v738, 4
        %v795 = vrot.slane %v739, 4
        %v800 = vrot.slane %v751, 4
        %v801 = vrot.slane %v752, 4
        %v806 = vrot.slane %v773, 4
        %v807 = vrot.slane %v774, 4
        %v810 = vsel %vm564, %v705, %v788
        %v811 = vsel %vm564, %v706, %v789
        %v812 = vsel %vm564, %v727, %v794
        %v813 = vsel %vm564, %v728, %v795
        %v814 = vsel %vm564, %v740, %v800
        %v815 = vsel %vm564, %v741, %v801
        %v816 = vsel %vm564, %v762, %v806
        %v817 = vsel %vm564, %v763, %v807
        %v818 = vld [vmem:[%s5] sm:$0xf]
        %v820 = vsel %vm574, %v818, 0
        %v823 = vsel %vm564, %v784, 0
        %v826 = vsel %vm564, %v785, 0
        %828 = vmatprep.subr.mxu0 %v811
        %829 = vmatpush1.msra.mxu0 %v810
        %830 = vmatprep.subr.mxu0 %v813
        %831 = vmatpush1.msra.mxu0 %v812
        %832 = vmatprep.subr.mxu0 %v815
        %833 = vmatpush1.msra.mxu0 %v814
        %834 = vmatprep.subr.mxu0 %v817
        %835 = vmatpush1.msra.mxu0 %v816
        %836 = vmatprep.subr.mxu0 %v826
        %837 = vmatpush1.msra.mxu0 %v823
        %838 = vmatprep.subr.mxu0 0.0
        %839 = vmatpush1.msra.mxu0 0.0
        %840 = vmatprep.subr.mxu0 0.0
        %841 = vmatpush1.msra.mxu0 0.0
        %842 = vmatprep.subr.mxu0 0.0
        %843 = vmatpush1.msra.mxu0 0.0
        %844 = vmatprep.subr.mxu0 0.0
        %845 = vmatpush1.msra.mxu0 0.0
        %846 = vmatprep.subr.mxu0 0.0
        %847 = vmatpush1.msra.mxu0 0.0
        %848 = vmatprep.subr.mxu0 0.0
        %849 = vmatpush1.msra.mxu0 0.0
        %850 = vmatprep.subr.mxu0 0.0
        %851 = vmatpush1.msra.mxu0 0.0
        %852 = vmatprep.subr.mxu0 0.0
        %853 = vmatpush1.msra.mxu0 0.0
        %854 = vmatprep.subr.mxu0 0.0
        %855 = vmatpush1.msra.mxu0 0.0
        %856 = vmatprep.subr.mxu0 0.0
        %857 = vmatpush1.msra.mxu0 0.0
        %858 = vmatprep.subr.mxu0 0.0
        %859 = vmatpush1.msra.mxu0 0.0
        %860 = vmatprep.subr.mxu0 0.0
        %861 = vmatpush1.msra.mxu0 0.0
        %862 = vmatprep.subr.mxu0 0.0
        %863 = vmatpush1.msra.mxu0 0.0
        %864 = vmatprep.subr.mxu0 0.0
        %865 = vmatpush1.msra.mxu0 0.0
        %866 = vmatprep.subr.mxu0 0.0
        %867 = vmatpush1.msra.mxu0 0.0
        %868 = vmatprep.subr.mxu0 0.0
        %869 = vmatpush1.msra.mxu0 0.0
        %870 = vmatprep.subr.mxu0 0.0
        %871 = vmatpush1.msra.mxu0 0.0
        %872 = vmatprep.subr.mxu0 0.0
        %873 = vmatpush1.msra.mxu0 0.0
        %874 = vmatprep.subr.mxu0 0.0
        %875 = vmatpush1.msra.mxu0 0.0
        %876 = vmatprep.subr.mxu0 0.0
        %877 = vmatpush1.msra.mxu0 0.0
        %878 = vmatprep.subr.mxu0 0.0
        %879 = vmatpush1.msra.mxu0 0.0
        %880 = vmatprep.subr.mxu0 0.0
        %881 = vmatpush1.msra.mxu0 0.0
        %882 = vmatprep.subr.mxu0 0.0
        %883 = vmatpush1.msra.mxu0 0.0
        %884 = vmatprep.subr.mxu0 0.0
        %885 = vmatpush1.msra.mxu0 0.0
        %886 = vmatprep.subr.mxu0 0.0
        %887 = vmatpush1.msra.mxu0 0.0
        %888 = vmatprep.subr.mxu0 0.0
        %889 = vmatpush1.msra.mxu0 0.0
        %890 = vmatprep.subr.mxu0 0.0
        %891 = vmatpush1.msra.mxu0 0.0
        %892 = vmatprep.mubr.f32.mxu0 0.0
        %893 = vmatmul.mubr.f32.gmra.mrb[0].mxu0 %v820
        %v894 = vpop.f32.mrb[0].mxu0
        %v895 = vadd.f32 0.0, %v894
        %v896 = vpop.f32.mrb[0].mxu0
        %v897 = vadd.f32 0.0, %v896
        %898 = vdwg.mxu0
        %v899 = vsel %vm564, %v895, 0.0
        %v900 = vsel %vm564, %v897, 0.0
        %v901 = vadd.f32 %v899, %v900
        %902 = vadd.xlane.f32.xlu0 %v901
        %v903 = vpop.xlane.xlu0 %902
        %v904 = vmul.f32 %v903, %v660
        %v905 = vsub.f32 %v895, %v904
        %v906 = vsub.f32 %v897, %v904
        %v907 = vmul.f32 %v905, %v905
        %v908 = vmul.f32 %v906, %v906
        %v909 = vsel %vm564, %v907, 0.0
        %v910 = vsel %vm564, %v908, 0.0
        %v911 = vadd.f32 %v909, %v910
        %912 = vadd.xlane.f32.xlu0 %v911
        %v913 = vpop.xlane.xlu0 %912
        %v914 = vmul.f32 %v913, %v660
        %v915 = vadd.f32 %v914, 1e-05
        %v916 = vrsqrt.pop %v915
        %v917 = vmul.f32 %v905, %v916
        %v918 = vmul.f32 %v906, %v916
        %v919 = vld [vmem:[%s6] sm:$0xf]
        %921 = vset.pattern.permute.xlu0 0
        %922 = vperm.xlu0 %921, %v919
        %v923 = vpop.permute.xlu0 %922
        %v925 = vmul.f32 %v917, %v923
        %v926 = vmul.f32 %v918, %v923
        %v927 = vld [vmem:[%s7] sm:$0xf]
        %929 = vset.pattern.permute.xlu0 0
        %930 = vperm.xlu0 %929, %v927
        %v931 = vpop.permute.xlu0 %930
        %v933 = vadd.f32 %v925, %v931
        %v934 = vadd.f32 %v926, %v931
        %v937 = vcombine.low %v933, %v934
        %v939 = vadd.f32 %v319, %v937
        %940 = vst [vmem:[%s313] sm:$0xff] %v939
        %s941 = sand.u32 %s204, 1
        %s942 = scalar_lea.sflag [#allocation4], %s941
        %s943 = sand.u32 %s204, 1
        %s944 = smul.addr %s943, 8
        %s945 = scalar_lea.vmem [#allocation5], %s944
        // Predicated region
        $region57: #{tpu_custom_call.1} parent=51 // pred_check
          %p946 = pneg %p214
        $region58: #{tpu_custom_call.1} parent=51 // pred_check_branch
          %948 = sbr.rel (%p946) target = $region60
        $region59: #{tpu_custom_call.1} parent=51 // pred_region
          %s950 = ssub.s32 128, 128
          %951 = vsyncadd %s942, %s950
          %s952 = smul.addr %s23, 2
          %s953 = smul.addr %s952, 64
          %s954 = scalar_lea.hbm %s8, %s953
          %s956 = sshll.u32 %s945, 4
          %s957 = int_to_ptr.vmem [resolvable:$true] %s956
          %959 = dma.vmem_to_hbm [thread:$0]  %s957, 128, %s954, %s942
        $region60: #{tpu_custom_call.1} parent=51 // pred_fallthru
          _
      $region52: #{tpu_custom_call.1} parent=5 // pred_fallthru
        _
      %p960 = scmp.le.s32.totalorder 2, %s18
      // Predicated region
      $region61: #{tpu_custom_call.1} parent=5 // pred_check
        %p961 = pneg %p960
      $region62: #{tpu_custom_call.1} parent=5 // pred_check_branch
        %963 = sbr.rel (%p961) target = $region64
      $region63: #{tpu_custom_call.1} parent=5 // pred_region
        %s964 = ssub.s32 %s18, 2
        // Predicated region
        $region65: #{tpu_custom_call.1} parent=63 // pred_check
          %p965 = pneg %p220
        $region66: #{tpu_custom_call.1} parent=63 // pred_check_branch
          %967 = sbr.rel (%p965) target = $region68
        $region67: #{tpu_custom_call.1} parent=63 // pred_region
          %s968 = sand.u32 %s205, 1
          %s969 = scalar_lea.sflag [#allocation4], %s968
          %s970 = sand.u32 %s205, 1
          %s971 = smul.addr %s970, 8
          %s972 = scalar_lea.vmem [#allocation5], %s971
          %973 = dma.done %s969, 128
        $region68: #{tpu_custom_call.1} parent=63 // pred_fallthru
          _
      $region64: #{tpu_custom_call.1} parent=5 // pred_fallthru
        _
    $region6: #{tpu_custom_call.1} parent=1 // loop_footer
      %s22 = sadd.s32 1, %s18
    $region7: #{tpu_custom_call.1} parent=1 // loop_footer_branch
      %17 = sbr.rel target = $region3
    $region8: #{tpu_custom_call.1} parent=1 // loop_exit
      _
    %974 = vsyncpa [#allocation3], 1
    %s975 = scalar_lea.sflag [#allocation3], 1
    %976 = vsyncpa %s975, 1
    %977 = vsyncpa [#allocation4], 1
    %s978 = scalar_lea.sflag [#allocation4], 1
    %979 = vsyncpa %s978, 1

</llo_original>
